<compile_context>
chip_gen: v7x
topology: tpu7x:2x2x1
jax: 0.10.0
libtpu: 0.0.40
codegen_flags: <defaults>
</compile_context>

<pallas_src>
import math

import jax
import jax.numpy as jnp
from jax import lax
from jax.experimental import pallas as pl
from jax.experimental.pallas import tpu as pltpu


def _round_up(x, m):
    return ((x + m - 1) // m) * m


def _compiler_params(sem, block_bytes):
    # Explicit scoped-VMEM budget: double-buffered blocks + headroom, capped so
    # it also fits v7x (64 MiB physical VMEM) and v5e's default scoped limit.
    limit = int(min(48 << 20, max(3 * int(block_bytes) + (4 << 20), 8 << 20)))
    return pltpu.CompilerParams(dimension_semantics=sem, vmem_limit_bytes=limit)


# ----------------------------------------------------------------------------
# Phase 1: per-channel sum / sum-of-squares of y = x @ W over all rows.
# ----------------------------------------------------------------------------
def _bn_stats(x3, w, valid_rows, tile_r):
    ns, rk, cin = x3.shape
    cout = w.shape[1]
    need_mask = rk != valid_rows

    def kernel(x_ref, w_ref, s1_ref, s2_ref):
        n = pl.program_id(0)
        i = pl.program_id(1)

        @pl.when(jnp.logical_and(n == 0, i == 0))
        def _():
            s1_ref[...] = jnp.zeros_like(s1_ref)
            s2_ref[...] = jnp.zeros_like(s2_ref)

        y = jnp.dot(x_ref[0], w_ref[...], preferred_element_type=jnp.float32)
        if need_mask:  # padded rows must not bias the batch statistics
            row = i * tile_r + lax.broadcasted_iota(jnp.int32, (tile_r, 1), 0)
            y = y * (row < valid_rows).astype(jnp.float32)
        s1_ref[...] += jnp.sum(y, axis=0, keepdims=True)
        s2_ref[...] += jnp.sum(y * y, axis=0, keepdims=True)

    blk = 2 * tile_r * cin * 2 + cin * cout * 2 + 2 * cout * 4
    s1, s2 = pl.pallas_call(
        kernel,
        out_shape=(jax.ShapeDtypeStruct((1, cout), jnp.float32),
                   jax.ShapeDtypeStruct((1, cout), jnp.float32)),
        grid_spec=pltpu.PrefetchScalarGridSpec(
            num_scalar_prefetch=0,
            grid=(ns, rk // tile_r),
            in_specs=[
                pl.BlockSpec((1, tile_r, cin), lambda n, i: (n, i, 0)),
                pl.BlockSpec((cin, cout), lambda n, i: (0, 0)),
            ],
            out_specs=[
                pl.BlockSpec((1, cout), lambda n, i: (0, 0)),
                pl.BlockSpec((1, cout), lambda n, i: (0, 0)),
            ],
        ),
        compiler_params=_compiler_params(("arbitrary", "arbitrary"), blk),
    )(x3, w)
    return s1[0], s2[0]


# ----------------------------------------------------------------------------
# Phase 2 (intermediate layers): next_slab = relu((x @ W) * scale + shift).
# ----------------------------------------------------------------------------
def _bn_relu_apply(x3, w, ss, tile_r):
    ns, rk, cin = x3.shape
    cout = w.shape[1]

    def kernel(x_ref, w_ref, ss_ref, out_ref):
        y = jnp.dot(x_ref[0], w_ref[...], preferred_element_type=jnp.float32)
        ssv = ss_ref[...]                      # [2, C] f32: row0=scale, row1=shift
        h = jnp.maximum(y * ssv[0:1, :] + ssv[1:2, :], 0.0)
        out_ref[0] = h.astype(out_ref.dtype)

    blk = (2 * tile_r * cin * 2 + cin * cout * 2 + 2 * cout * 4
           + 2 * tile_r * cout * 2)
    return pl.pallas_call(
        kernel,
        out_shape=jax.ShapeDtypeStruct((ns, rk, cout), jnp.bfloat16),
        grid_spec=pltpu.PrefetchScalarGridSpec(
            num_scalar_prefetch=0,
            grid=(ns, rk // tile_r),
            in_specs=[
                pl.BlockSpec((1, tile_r, cin), lambda n, i: (n, i, 0)),
                pl.BlockSpec((cin, cout), lambda n, i: (0, 0)),
                pl.BlockSpec((2, cout), lambda n, i: (0, 0)),
            ],
            out_specs=pl.BlockSpec((1, tile_r, cout), lambda n, i: (n, i, 0)),
        ),
        compiler_params=_compiler_params(("parallel", "parallel"), blk),
    )(x3, w, ss)


# ----------------------------------------------------------------------------
# Phase 2 (last layer): relu((x @ W) * scale + shift), max over neighbours.
# ----------------------------------------------------------------------------
def _bn_relu_apply_max(x3, w, ss, tile_r):
    ns, rk, cin = x3.shape
    cout = w.shape[1]

    def kernel(x_ref, w_ref, ss_ref, out_ref):
        n = pl.program_id(1)

        @pl.when(n == 0)
        def _():
            out_ref[...] = jnp.zeros_like(out_ref)

        y = jnp.dot(x_ref[0], w_ref[...], preferred_element_type=jnp.float32)
        ssv = ss_ref[...]
        h = jnp.maximum(y * ssv[0:1, :] + ssv[1:2, :], 0.0)
        # post-ReLU values are >= 0, so max against the zero init is exact.
        out_ref[...] = jnp.maximum(out_ref[...], h)

    blk = (2 * tile_r * cin * 2 + cin * cout * 2 + 2 * cout * 4
           + tile_r * cout * 4)
    return pl.pallas_call(
        kernel,
        out_shape=jax.ShapeDtypeStruct((rk, cout), jnp.float32),
        grid_spec=pltpu.PrefetchScalarGridSpec(
            num_scalar_prefetch=0,
            grid=(rk // tile_r, ns),        # neighbour (reduction) axis last
            in_specs=[
                pl.BlockSpec((1, tile_r, cin), lambda i, n: (n, i, 0)),
                pl.BlockSpec((cin, cout), lambda i, n: (0, 0)),
                pl.BlockSpec((2, cout), lambda i, n: (0, 0)),
            ],
            out_specs=pl.BlockSpec((tile_r, cout), lambda i, n: (i, 0)),
        ),
        compiler_params=_compiler_params(("parallel", "arbitrary"), blk),
    )(x3, w, ss)


# ----------------------------------------------------------------------------
# Shared-MLP + BN(train) + ReLU stack + neighbour max (the torch hot path).
# ----------------------------------------------------------------------------
def mlp_max_pallas(new_points, params, eps=1e-5):
    """new_points: [B, S, ns, Cin] f32 -> [B, S, Cout] f32."""
    B, S, ns, cin = new_points.shape
    bk = B * S
    tile_r = min(512, _round_up(bk, 16))          # bf16-friendly sublane tile
    rk = _round_up(bk, tile_r)
    cin_pad = _round_up(cin, 128)

    # rows = (neighbour, b*S+s); channels on the lane axis; bf16 slab.
    x = jnp.transpose(new_points, (2, 0, 1, 3)).reshape(ns, bk, cin)
    x = jnp.pad(x, ((0, 0), (0, rk - bk), (0, cin_pad - cin)))
    x = x.astype(jnp.bfloat16)

    n_total = float(ns * bk)                      # BN reduces over (B, ns, S)
    n_layers = len(params)
    out = None
    for li, (w, _b, gamma, beta) in enumerate(params):
        # NOTE: the Conv2d bias cancels exactly under training-mode BatchNorm
        # (it disappears in y - mean), so it is dropped from the kernel.
        c_in, c_out = w.shape
        cin_p, cout_p = _round_up(c_in, 128), _round_up(c_out, 128)
        assert cin_p == x.shape[-1]
        w_p = jnp.zeros((cin_p, cout_p), jnp.bfloat16)
        w_p = w_p.at[:c_in, :c_out].set(w.astype(jnp.bfloat16))
        g_p = jnp.zeros((cout_p,), jnp.float32).at[:c_out].set(gamma)
        b_p = jnp.zeros((cout_p,), jnp.float32).at[:c_out].set(beta)

        # phase 1: single-pass sum / sumsq over all valid rows
        s1, s2 = _bn_stats(x, w_p, bk, tile_r)
        mean = s1 / n_total
        var = jnp.maximum(s2 / n_total - mean * mean, 0.0)
        scale = g_p * lax.rsqrt(var + eps)        # folded BN + affine
        shift = b_p - mean * scale
        ss = jnp.stack([scale, shift], axis=0)    # [2, Cout_pad] f32

        # phase 2: apply scale/shift + ReLU (+ neighbour max on the last layer)
        if li < n_layers - 1:
            x = _bn_relu_apply(x, w_p, ss, tile_r)
        else:
            out = _bn_relu_apply_max(x, w_p, ss, tile_r)

    c_out = params[-1][0].shape[1]
    return out[:bk, :c_out].reshape(B, S, c_out)


# ----------------------------------------------------------------------------
# JAX glue: sampling / grouping (data-dependent gathers & the serial FPS loop
# have no clean Pallas TPU equivalent, so they stay in plain JAX).
# ----------------------------------------------------------------------------
def index_points(points, idx):
    B = points.shape[0]
    flat = idx.reshape(B, -1)
    gathered = jnp.take_along_axis(points, flat[..., None], axis=1)
    return gathered.reshape(*idx.shape, points.shape[-1])


def square_distance(src, dst):
    # ||a||^2 + ||b||^2 - 2 a.b^T  (matmul form; avoids the [B,N,M,3] broadcast)
    d = -2.0 * jnp.einsum('bnc,bmc->bnm', src, dst)
    d = d + jnp.sum(src * src, axis=-1)[:, :, None]
    d = d + jnp.sum(dst * dst, axis=-1)[:, None, :]
    return d


def farthest_point_sample(xyz, npoint):
    # TODO(synk): torch starts from torch.randint(0, N, (B,)); we start
    # deterministically at index 0 so the forward pass is reproducible.
    B, N, _ = xyz.shape
    batch_idx = jnp.arange(B)

    def body(i, carry):
        distance, farthest, centroids = carry
        centroids = centroids.at[:, i].set(farthest)
        centroid = xyz[batch_idx, farthest][:, None, :]          # [B, 1, 3]
        dist = jnp.sum((xyz - centroid) ** 2, axis=-1)           # [B, N]
        distance = jnp.minimum(distance, dist)
        farthest = jnp.argmax(distance, axis=-1).astype(jnp.int32)
        return distance, farthest, centroids

    init = (jnp.full((B, N), 1e10, jnp.float32),
            jnp.zeros((B,), jnp.int32),
            jnp.zeros((B, npoint), jnp.int32))
    _, _, centroids = lax.fori_loop(0, npoint, body, init)
    return centroids                                             # [B, npoint]


def sample_and_group(npoint, nsample, xyz, points):
    """knn=True path of the torch sample_and_group."""
    fps_idx = farthest_point_sample(xyz, npoint)                 # [B, S]
    new_xyz = index_points(xyz, fps_idx)                         # [B, S, 3]
    dists = square_distance(new_xyz, xyz)                        # [B, S, N]
    _, idx = lax.top_k(-dists, nsample)                          # [B, S, ns]
    grouped_xyz = index_points(xyz, idx)                         # [B, S, ns, 3]
    grouped_xyz_norm = grouped_xyz - new_xyz[:, :, None, :]
    grouped_points = index_points(points, idx)                   # [B, S, ns, D]
    new_points = jnp.concatenate([grouped_xyz_norm, grouped_points], axis=-1)
    return new_xyz, new_points


def transition_down(xyz, points, npoint, nsample, params):
    """xyz [B,N,3], points [B,N,D] -> (new_xyz [B,S,3], feats [B,S,Cout])."""
    new_xyz, new_points = sample_and_group(npoint, nsample, xyz, points)
    feats = mlp_max_pallas(new_points, params)
    return new_xyz, feats


# ----------------------------------------------------------------------------
# Pure-JAX f32 reference of the torch Conv2d(1x1)+BN(train)+ReLU stack + max.
# ----------------------------------------------------------------------------
def mlp_max_reference(new_points, params, eps=1e-5):
    x = jnp.transpose(new_points, (0, 3, 2, 1))                  # [B, C, ns, S]
    for (w, b, gamma, beta) in params:
        y = jnp.einsum('bcns,cd->bdns', x, w) + b[None, :, None, None]
        mean = jnp.mean(y, axis=(0, 2, 3), keepdims=True)
        var = jnp.mean((y - mean) ** 2, axis=(0, 2, 3), keepdims=True)
        y = (y - mean) * lax.rsqrt(var + eps)
        x = jnp.maximum(y * gamma[None, :, None, None]
                        + beta[None, :, None, None], 0.0)
    return jnp.transpose(jnp.max(x, axis=2), (0, 2, 1))          # [B, S, C]


def init_params(key, channels):
    """Conv2d(1x1) weight/bias + BatchNorm2d gamma/beta per MLP layer."""
    params = []
    last = channels[0]
    for c in channels[1:]:
        key, k_w, k_b = jax.random.split(key, 3)
        bound = 1.0 / math.sqrt(last)
        w = jax.random.uniform(k_w, (last, c), jnp.float32, -bound, bound)
        b = jax.random.uniform(k_b, (c,), jnp.float32, -bound, bound)
        gamma = jnp.ones((c,), jnp.float32)
        beta = jnp.zeros((c,), jnp.float32)
        params.append((w, b, gamma, beta))
        last = c
    return params


if __name__ == "__main__":
    key = jax.random.PRNGKey(0)
    kx, kp, kw = jax.random.split(key, 3)

    # TransitionDown(k=8, nneighbor=8, channels=[32, 64, 64])  (channels[0]=3+D)
    B, N, D = 2, 32, 29
    k_points, nneighbor = 8, 8
    channels = [3 + D, 64, 64]

    xyz = jax.random.normal(kx, (B, N, 3), jnp.float32)
    points = jax.random.normal(kp, (B, N, D), jnp.float32)
    params = init_params(kw, channels)

    new_xyz, new_feats = transition_down(xyz, points, k_points, nneighbor, params)
    jax.block_until_ready((new_xyz, new_feats))

    assert new_xyz.shape == (B, k_points, 3)
    assert new_feats.shape == (B, k_points, channels[-1])
    assert bool(jnp.all(jnp.isfinite(new_feats)))

    # Numerics vs. a pure-JAX f32 reference (same grouping, same params).
    # Loose tolerance: the kernel uses bf16 activations/weights by design.
    _, new_points = sample_and_group(k_points, nneighbor, xyz, points)
    ref = mlp_max_reference(new_points, params)
    assert bool(jnp.max(jnp.abs(new_feats - ref)) < 2e-1)

    print("KERNEL_OK")
</pallas_src>

<mosaic_0001>
module attributes {stable_mosaic.version = 11 : i64} {
  func.func @kernel(%arg0: i32, %arg1: i32, %arg2: memref<1x16x128xbf16, #tpu.memory_space<vmem>>, %arg3: memref<128x128xbf16, #tpu.memory_space<vmem>>, %arg4: memref<1x128xf32, #tpu.memory_space<vmem>>, %arg5: memref<1x128xf32, #tpu.memory_space<vmem>>) attributes {dimension_semantics = [#tpu.dimension_semantics<arbitrary>, #tpu.dimension_semantics<arbitrary>], iteration_bounds = array<i64: 8, 1>, scalar_prefetch = 0 : i64, scratch_operands = 0 : i64, tpu.core_type = #tpu.core_type<tc>, window_params = [{transform_indices = @transform_0, window_bounds = array<i64: 1, 16, 128>}, {pipeline_mode = #tpu.pipeline_mode<synchronous>, transform_indices = @transform_1, window_bounds = array<i64: 128, 128>}, {pipeline_mode = #tpu.pipeline_mode<synchronous>, transform_indices = @transform_2, window_bounds = array<i64: 1, 128>}, {pipeline_mode = #tpu.pipeline_mode<synchronous>, transform_indices = @transform_3, window_bounds = array<i64: 1, 128>}]} {
    %c0_i32 = arith.constant 0 : i32
    %0 = arith.cmpi eq, %arg0, %c0_i32 : i32
    %c0_i32_0 = arith.constant 0 : i32
    %1 = arith.cmpi eq, %arg1, %c0_i32_0 : i32
    %2 = arith.andi %0, %1 : i1
    %3 = arith.extui %2 : i1 to i32
    %c0_i32_1 = arith.constant 0 : i32
    %4 = arith.cmpi ne, %3, %c0_i32_1 : i32
    scf.if %4 {
      %cst_16 = arith.constant 0.000000e+00 : f32
      %20 = vector.broadcast %cst_16 : f32 to vector<1x128xf32>
      %c0_17 = arith.constant 0 : index
      %c0_18 = arith.constant 0 : index
      %21 = vector.load %arg4[%c0_17, %c0_18] : memref<1x128xf32, #tpu.memory_space<vmem>>, vector<1x128xf32>
      tpu.vector_store %arg4[%c0_17, %c0_18], %20 {strides = array<i32>} : memref<1x128xf32, #tpu.memory_space<vmem>>, vector<1x128xf32>,
      %cst_19 = arith.constant 0.000000e+00 : f32
      %22 = vector.broadcast %cst_19 : f32 to vector<1x128xf32>
      %c0_20 = arith.constant 0 : index
      %c0_21 = arith.constant 0 : index
      %23 = vector.load %arg5[%c0_20, %c0_21] : memref<1x128xf32, #tpu.memory_space<vmem>>, vector<1x128xf32>
      tpu.vector_store %arg5[%c0_20, %c0_21], %22 {strides = array<i32>} : memref<1x128xf32, #tpu.memory_space<vmem>>, vector<1x128xf32>,
    } else {
    }
    %c0 = arith.constant 0 : index
    %c0_2 = arith.constant 0 : index
    %c0_3 = arith.constant 0 : index
    %5 = vector.load %arg2[%c0, %c0_2, %c0_3] : memref<1x16x128xbf16, #tpu.memory_space<vmem>>, vector<1x16x128xbf16>
    %6 = vector.shape_cast %5 : vector<1x16x128xbf16> to vector<16x128xbf16>
    %c0_4 = arith.constant 0 : index
    %c0_5 = arith.constant 0 : index
    %7 = vector.load %arg3[%c0_4, %c0_5] : memref<128x128xbf16, #tpu.memory_space<vmem>>, vector<128x128xbf16>
    %cst = arith.constant dense<0.000000e+00> : vector<16x128xf32>
    %8 = tpu.matmul %6, %7, %cst {dimension_numbers = #tpu.dot_dimension_numbers<[1], [0], [0], [1], [0, 0, 1, 1], [], []>} : vector<16x128xbf16>, vector<128x128xbf16>, vector<16x128xf32> -> vector<16x128xf32>
    %c0_6 = arith.constant 0 : index
    %c0_7 = arith.constant 0 : index
    %9 = vector.load %arg4[%c0_6, %c0_7] : memref<1x128xf32, #tpu.memory_space<vmem>>, vector<1x128xf32>
    %cst_8 = arith.constant dense<0.000000e+00> : vector<128xf32>
    %10 = vector.multi_reduction <add>, %8, %cst_8 [0] : vector<16x128xf32> to vector<128xf32>
    %11 = vector.shape_cast %10 : vector<128xf32> to vector<1x128xf32>
    %12 = arith.addf %9, %11 : vector<1x128xf32>
    %c0_9 = arith.constant 0 : index
    %c0_10 = arith.constant 0 : index
    %13 = vector.load %arg4[%c0_9, %c0_10] : memref<1x128xf32, #tpu.memory_space<vmem>>, vector<1x128xf32>
    tpu.vector_store %arg4[%c0_9, %c0_10], %12 {strides = array<i32>} : memref<1x128xf32, #tpu.memory_space<vmem>>, vector<1x128xf32>,
    %c0_11 = arith.constant 0 : index
    %c0_12 = arith.constant 0 : index
    %14 = vector.load %arg5[%c0_11, %c0_12] : memref<1x128xf32, #tpu.memory_space<vmem>>, vector<1x128xf32>
    %15 = arith.mulf %8, %8 : vector<16x128xf32>
    %cst_13 = arith.constant dense<0.000000e+00> : vector<128xf32>
    %16 = vector.multi_reduction <add>, %15, %cst_13 [0] : vector<16x128xf32> to vector<128xf32>
    %17 = vector.shape_cast %16 : vector<128xf32> to vector<1x128xf32>
    %18 = arith.addf %14, %17 : vector<1x128xf32>
    %c0_14 = arith.constant 0 : index
    %c0_15 = arith.constant 0 : index
    %19 = vector.load %arg5[%c0_14, %c0_15] : memref<1x128xf32, #tpu.memory_space<vmem>>, vector<1x128xf32>
    tpu.vector_store %arg5[%c0_14, %c0_15], %18 {strides = array<i32>} : memref<1x128xf32, #tpu.memory_space<vmem>>, vector<1x128xf32>,
    return
  }
  func.func @transform_0(%arg0: i32, %arg1: i32) -> (i32, i32, i32) {
    %c0_i32 = arith.constant 0 : i32
    %c0_i32_0 = arith.constant 0 : i32
    return %arg0, %arg1, %c0_i32 : i32, i32, i32
  }
  func.func @transform_1(%arg0: i32, %arg1: i32) -> (i32, i32) {
    %c0_i32 = arith.constant 0 : i32
    %c0_i32_0 = arith.constant 0 : i32
    %c0_i32_1 = arith.constant 0 : i32
    return %c0_i32, %c0_i32_0 : i32, i32
  }
  func.func @transform_2(%arg0: i32, %arg1: i32) -> (i32, i32) {
    %c0_i32 = arith.constant 0 : i32
    %c0_i32_0 = arith.constant 0 : i32
    %c0_i32_1 = arith.constant 0 : i32
    return %c0_i32, %c0_i32_0 : i32, i32
  }
  func.func @transform_3(%arg0: i32, %arg1: i32) -> (i32, i32) {
    %c0_i32 = arith.constant 0 : i32
    %c0_i32_0 = arith.constant 0 : i32
    %c0_i32_1 = arith.constant 0 : i32
    return %c0_i32, %c0_i32_0 : i32, i32
  }
}

</mosaic_0001>

<llo_original>
// kernel: tpu_custom_call.1
$region0: #{tpu_custom_call.1}
  #allocation0 [shape = 'u32[]', space=smem, size = 0x4, offset = 0x4, fixed_abs, tag = 'smem constant byte address 0x4 - core index']
  #allocation1 [shape = 'u32[144,128]{1,0:T(1,128)}', space=vmem, size = 0x12000, scoped, tag = 'internal scratch']
  %s0 = inlined_call_operand.hbm [shape: bf16[8,16,128], index: 0, kind: input, shape index: {}]
  %s1 = inlined_call_operand.hbm [shape: bf16[128,128], index: 1, kind: input, shape index: {}]
  %s2 = inlined_call_operand.hbm [shape: f32[1,128], index: 2, kind: output, shape index: {0}]
  %s3 = inlined_call_operand.hbm [shape: f32[1,128], index: 3, kind: output, shape index: {1}]
  %4 = xla_tuple %s2, %s3
  %s5 = sld [smem:[#allocation0]]
  $region61: #{tpu_custom_call.1} parent=0
    _
  %s7 = ssub.s32 1, %s5
  %s8 = scalar_select 0, %s7, %s5
  $region1: #{tpu_custom_call.1} parent=0
    #allocation2 [shape = 'u8[8192]{0}', space=vmem, size = 0x2000, scoped, tag = 'input window, operand 0']
    #allocation3 [shape = 's32[2]{0}', space=sflag, size = 0x8, scoped, tag = 'scoped memory for tpu_custom_call.1']
    #allocation4 [shape = 's32[2]{0}', space=sflag, size = 0x8, scoped, tag = 'scoped memory for tpu_custom_call.1']
    #allocation5 [shape = 'u8[32768]{0}', space=vmem, size = 0x8000, scoped, tag = 'input window, operand 1, single buffered']
    #allocation6 [shape = 's32[1]{0}', space=sflag, size = 0x4, scoped, tag = 'scoped memory for tpu_custom_call.1']
    #allocation7 [shape = 'u8[512]{0}', space=vmem, size = 0x400, scoped, tag = 'output window, operand 0, single buffered']
    #allocation8 [shape = 'u8[512]{0}', space=vmem, size = 0x400, scoped, tag = 'output window, operand 1, single buffered']
    #allocation9 [shape = 's32[1]{0}', space=sflag, size = 0x4, scoped, tag = 'scoped memory for tpu_custom_call.1']
    %9 = vsyncpa [#allocation3], 0
    %s10 = scalar_lea.sflag [#allocation3], 1
    %11 = vsyncpa %s10, 0
    %12 = vsyncpa [#allocation6], 0
    %13 = vsyncpa [#allocation4], 0
    %14 = vsyncpa [#allocation9], 0
    loop: start=0, step=1, limit=10
    $region2: #{tpu_custom_call.1} parent=1 // loop_pre_header
      _
    $region3: #{tpu_custom_call.1} parent=1 // loop_header
      %s16 = sphi 0, %s20
      %p17 = scmp.ge.s32.totalorder %s16, 10
      %s23 = sphi 0, %s35
      %s24 = sphi 0, %s31
      %s25 = sphi 0, %s23
      %s26 = sphi 0, %s24
      %s27 = sphi 0, %s25
      %s28 = sphi 0, %s26
      %s40 = sphi 0, %s42
      %s43 = sphi 0, %s40
      %s44 = sphi 0, %s43
      %s60 = sphi 0, %s44
      %s64 = sphi 0, %s64
      %s66 = sphi 0, %s64
      %s67 = sphi 0, %s66
      %s81 = sphi 0, %s67
      %s85 = sphi 0, %s85
      %s87 = sphi 0, %s85
      %s88 = sphi 0, %s87
      %s102 = sphi 0, %s88
      %s106 = sphi 0, %s106
      %s108 = sphi 0, %s106
      %s109 = sphi 0, %s108
      %s123 = sphi 0, %s109
    $region4: #{tpu_custom_call.1} parent=1 // loop_header_branch
      %19 = sbr.rel (%p17) target = $region8
    $region5: #{tpu_custom_call.1} parent=1 // loop_body
      %s21 = ssub.s32 %s16, 1
      %s22 = ssub.s32 %s16, 2
      %s29 = sadd.s32 1, %s24
      %p30 = scmp.ge.s32.totalorder %s29, 1
      %s31 = scalar_select %p30, 0, %s29
      %s32 = sadd.s32 1, %s23
      %s33 = scalar_select %p30, %s32, %s23
      %p34 = scmp.ge.s32.totalorder %s33, 8
      %s35 = scalar_select %p34, 0, %s33
      %s36 = ssub.s32 %s23, %s35
      %s37 = ssub.s32 %s24, %s31
      %s38 = sor.u32 %s36, %s37
      %p39 = scmp.eq.s32.totalorder %s38, 0
      %s41 = sadd.s32 %s40, 1
      %s42 = scalar_select %p39, %s40, %s41
      %p45 = pneg %p39
      %p46 = scmp.eq.s32.totalorder %s16, 7
      %p47 = por %p45, %p46
      %p48 = scmp.ne.s32.totalorder %s40, %s43
      %p49 = scmp.eq.s32.totalorder %s16, 0
      %p50 = por %p48, %p49
      %p51 = scmp.ne.s32.totalorder %s40, %s43
      %p52 = scmp.eq.s32.totalorder %s21, 7
      %p53 = por %p51, %p52
      %p54 = scmp.ne.s32.totalorder %s43, %s44
      %p55 = scmp.eq.s32.totalorder %s21, 0
      %p56 = por %p54, %p55
      %p57 = scmp.ne.s32.totalorder %s43, %s44
      %p58 = scmp.eq.s32.totalorder %s22, 7
      %p59 = por %p57, %p58
      %p61 = scmp.ne.s32.totalorder %s44, %s60
      %p62 = scmp.eq.s32.totalorder %s22, 0
      %p63 = por %p61, %p62
      %s65 = sadd.s32 %s64, 1
      %p68 = scmp.eq.s32.totalorder %s16, 7
      %p69 = scmp.ne.s32.totalorder %s64, %s66
      %p70 = scmp.eq.s32.totalorder %s16, 0
      %p71 = por %p69, %p70
      %p72 = scmp.ne.s32.totalorder %s64, %s66
      %p73 = scmp.eq.s32.totalorder %s21, 7
      %p74 = por %p72, %p73
      %p75 = scmp.ne.s32.totalorder %s66, %s67
      %p76 = scmp.eq.s32.totalorder %s21, 0
      %p77 = por %p75, %p76
      %p78 = scmp.ne.s32.totalorder %s66, %s67
      %p79 = scmp.eq.s32.totalorder %s22, 7
      %p80 = por %p78, %p79
      %p82 = scmp.ne.s32.totalorder %s67, %s81
      %p83 = scmp.eq.s32.totalorder %s22, 0
      %p84 = por %p82, %p83
      %s86 = sadd.s32 %s85, 1
      %p89 = scmp.eq.s32.totalorder %s16, 7
      %p90 = scmp.ne.s32.totalorder %s85, %s87
      %p91 = scmp.eq.s32.totalorder %s16, 0
      %p92 = por %p90, %p91
      %p93 = scmp.ne.s32.totalorder %s85, %s87
      %p94 = scmp.eq.s32.totalorder %s21, 7
      %p95 = por %p93, %p94
      %p96 = scmp.ne.s32.totalorder %s87, %s88
      %p97 = scmp.eq.s32.totalorder %s21, 0
      %p98 = por %p96, %p97
      %p99 = scmp.ne.s32.totalorder %s87, %s88
      %p100 = scmp.eq.s32.totalorder %s22, 7
      %p101 = por %p99, %p100
      %p103 = scmp.ne.s32.totalorder %s88, %s102
      %p104 = scmp.eq.s32.totalorder %s22, 0
      %p105 = por %p103, %p104
      %s107 = sadd.s32 %s106, 1
      %p110 = scmp.eq.s32.totalorder %s16, 7
      %p111 = scmp.ne.s32.totalorder %s106, %s108
      %p112 = scmp.eq.s32.totalorder %s16, 0
      %p113 = por %p111, %p112
      %p114 = scmp.ne.s32.totalorder %s106, %s108
      %p115 = scmp.eq.s32.totalorder %s21, 7
      %p116 = por %p114, %p115
      %p117 = scmp.ne.s32.totalorder %s108, %s109
      %p118 = scmp.eq.s32.totalorder %s21, 0
      %p119 = por %p117, %p118
      %p120 = scmp.ne.s32.totalorder %s108, %s109
      %p121 = scmp.eq.s32.totalorder %s22, 7
      %p122 = por %p120, %p121
      %p124 = scmp.ne.s32.totalorder %s109, %s123
      %p125 = scmp.eq.s32.totalorder %s22, 0
      %p126 = por %p124, %p125
      %p127 = scmp.le.s32.totalorder 1, %s16
      %p128 = scmp.lt.s32.totalorder %s16, 9
      %p129 = pnand %p127, %p128
      %p130 = pneg %p129
      // Predicated region
      $region9: #{tpu_custom_call.1} parent=5 // pred_check
        _
      $region10: #{tpu_custom_call.1} parent=5 // pred_check_branch
        %132 = sbr.rel (%p129) target = $region12
      $region11: #{tpu_custom_call.1} parent=5 // pred_region
        %s133 = ssub.s32 %s16, 1
        // Predicated region
        $region13: #{tpu_custom_call.1} parent=11 // pred_check
          %p134 = pneg %p77
        $region14: #{tpu_custom_call.1} parent=11 // pred_check_branch
          %136 = sbr.rel (%p134) target = $region16
        $region15: #{tpu_custom_call.1} parent=11 // pred_region
          %s138 = ssub.s32 1024, 1024
          %139 = vsyncadd [#allocation6], %s138
          %s140 = sshll.u32 [#allocation5], 4
          %s141 = int_to_ptr.vmem [resolvable:$true] %s140
          %146 = dma.hbm_to_vmem [thread:$0]  %s1, 1024, %s141, [#allocation6], 64, 64, 4
        $region16: #{tpu_custom_call.1} parent=11 // pred_fallthru
          _
      $region12: #{tpu_custom_call.1} parent=5 // pred_fallthru
        _
      %p147 = scmp.lt.s32.totalorder %s16, 8
      // Predicated region
      $region17: #{tpu_custom_call.1} parent=5 // pred_check
        %p148 = pneg %p147
      $region18: #{tpu_custom_call.1} parent=5 // pred_check_branch
        %150 = sbr.rel (%p148) target = $region20
      $region19: #{tpu_custom_call.1} parent=5 // pred_region
        // Predicated region
        $region21: #{tpu_custom_call.1} parent=19 // pred_check
          %p151 = pneg %p50
        $region22: #{tpu_custom_call.1} parent=19 // pred_check_branch
          %153 = sbr.rel (%p151) target = $region24
        $region23: #{tpu_custom_call.1} parent=19 // pred_region
          %s154 = sand.u32 %s40, 1
          %s155 = scalar_lea.sflag [#allocation3], %s154
          %s156 = sand.u32 %s40, 1
          %s157 = smul.addr %s156, 8
          %s158 = scalar_lea.vmem [#allocation2], %s157
          %s159 = smul.u32 2, %s24
          %s161 = ssub.s32 128, 128
          %162 = vsyncadd %s155, %s161
          %s163 = smul.addr %s23, 2
          %s164 = sadd.s32 %s159, %s163
          %s165 = smul.addr %s164, 64
          %s166 = scalar_lea.hbm %s0, %s165
          %s167 = sshll.u32 %s158, 4
          %s168 = int_to_ptr.vmem [resolvable:$true] %s167
          %173 = dma.hbm_to_vmem [thread:$0]  %s166, 128, %s168, %s155, 64, 64, 4
        $region24: #{tpu_custom_call.1} parent=19 // pred_fallthru
          _
      $region20: #{tpu_custom_call.1} parent=5 // pred_fallthru
        _
      %p174 = scmp.le.s32.totalorder 1, %s16
      %p175 = scmp.lt.s32.totalorder %s16, 9
      %p176 = pnand %p174, %p175
      %p177 = pneg %p176
      // Predicated region
      $region25: #{tpu_custom_call.1} parent=5 // pred_check
        _
      $region26: #{tpu_custom_call.1} parent=5 // pred_check_branch
        %179 = sbr.rel (%p176) target = $region28
      $region27: #{tpu_custom_call.1} parent=5 // pred_region
        %s180 = ssub.s32 %s16, 1
        %s181 = sand.u32 %s43, 1
        %s182 = scalar_lea.sflag [#allocation3], %s181
        %s183 = sand.u32 %s43, 1
        %s184 = smul.addr %s183, 8
        %s185 = scalar_lea.vmem [#allocation2], %s184
        // Predicated region
        $region29: #{tpu_custom_call.1} parent=27 // pred_check
          %p186 = pneg %p56
        $region30: #{tpu_custom_call.1} parent=27 // pred_check_branch
          %188 = sbr.rel (%p186) target = $region32
        $region31: #{tpu_custom_call.1} parent=27 // pred_region
          %189 = dma.done %s182, 128
        $region32: #{tpu_custom_call.1} parent=27 // pred_fallthru
          _
        // Predicated region
        $region33: #{tpu_custom_call.1} parent=27 // pred_check
          %p190 = pneg %p77
        $region34: #{tpu_custom_call.1} parent=27 // pred_check_branch
          %192 = sbr.rel (%p190) target = $region36
        $region35: #{tpu_custom_call.1} parent=27 // pred_region
          %193 = dma.done [#allocation6], 1024
        $region36: #{tpu_custom_call.1} parent=27 // pred_fallthru
          _
        %s194 = sand.u32 %s43, 1
        %s195 = scalar_lea.sflag [#allocation3], %s194
        %s196 = sand.u32 %s43, 1
        %s197 = smul.addr %s196, 8
        %s198 = scalar_lea.vmem [#allocation2], %s197
        %p199 = pneg %p56
        %p200 = pneg %p53
        %p201 = pneg %p77
        %p202 = pneg %p74
        %p203 = pneg %p98
        %p204 = pneg %p95
        %p205 = pneg %p119
        %p206 = pneg %p116
        %s207 = smul.u32 2, %s26
        %p209 = scmp.eq.s32.totalorder %s25, 0
        %p210 = scmp.eq.s32.totalorder %s26, 0
        %p211 = pnand %p209, %p210
        %p212 = pneg %p211
        // Predicated region
        $region37: #{tpu_custom_call.1} parent=27 // pred_check
          _
        $region38: #{tpu_custom_call.1} parent=27 // pred_check_branch
          %214 = sbr.rel (%p211) target = $region40
        $region39: #{tpu_custom_call.1} parent=27 // pred_region
          %215 = vst [vmem:[#allocation7] sm:$0x1] 0.0
          %216 = vst [vmem:[#allocation8] sm:$0x1] 0.0
        $region40: #{tpu_custom_call.1} parent=27 // pred_fallthru
          _
        %v217 = vld [vmem:[%s185] sm:$0xf]
        %v218 = vld [vmem:[%s185 + $0x4] sm:$0xf]
        %v219 = vld [vmem:[#allocation5] sm:$0xf]
        %v220 = vld [vmem:[#allocation5 + $0x4] sm:$0xf]
        %v221 = vld [vmem:[#allocation5 + $0x8] sm:$0xf]
        %v222 = vld [vmem:[#allocation5 + $0xc] sm:$0xf]
        %v223 = vld [vmem:[#allocation5 + $0x10] sm:$0xf]
        %v224 = vld [vmem:[#allocation5 + $0x14] sm:$0xf]
        %v225 = vld [vmem:[#allocation5 + $0x18] sm:$0xf]
        %v226 = vld [vmem:[#allocation5 + $0x1c] sm:$0xf]
        %v227 = vld [vmem:[#allocation5 + $0x20] sm:$0xf]
        %v228 = vld [vmem:[#allocation5 + $0x24] sm:$0xf]
        %v229 = vld [vmem:[#allocation5 + $0x28] sm:$0xf]
        %v230 = vld [vmem:[#allocation5 + $0x2c] sm:$0xf]
        %v231 = vld [vmem:[#allocation5 + $0x30] sm:$0xf]
        %v232 = vld [vmem:[#allocation5 + $0x34] sm:$0xf]
        %v233 = vld [vmem:[#allocation5 + $0x38] sm:$0xf]
        %v234 = vld [vmem:[#allocation5 + $0x3c] sm:$0xf]
        %v237 = vunpack.c.l.b16 %v217
        %v238 = vunpack.c.l.b16 %v218
        %v239 = vpack.c.b16 %v238, %v237
        %v257 = vunpack.c.l.b16 %v219
        %v258 = vunpack.c.l.b16 %v220
        %v259 = vunpack.c.l.b16 %v221
        %v260 = vunpack.c.l.b16 %v222
        %v261 = vunpack.c.l.b16 %v223
        %v262 = vunpack.c.l.b16 %v224
        %v263 = vunpack.c.l.b16 %v225
        %v264 = vunpack.c.l.b16 %v226
        %v265 = vunpack.c.l.b16 %v227
        %v266 = vunpack.c.l.b16 %v228
        %v267 = vunpack.c.l.b16 %v229
        %v268 = vunpack.c.l.b16 %v230
        %v269 = vunpack.c.l.b16 %v231
        %v270 = vunpack.c.l.b16 %v232
        %v271 = vunpack.c.l.b16 %v233
        %v272 = vunpack.c.l.b16 %v234
        %v273 = vpack.c.b16 %v258, %v257
        %v274 = vpack.c.b16 %v260, %v259
        %v275 = vpack.c.b16 %v262, %v261
        %v276 = vpack.c.b16 %v264, %v263
        %v277 = vpack.c.b16 %v266, %v265
        %v278 = vpack.c.b16 %v268, %v267
        %v279 = vpack.c.b16 %v270, %v269
        %v280 = vpack.c.b16 %v272, %v271
        %289 = vmatprep.subr.bf16.mxu0 0
        %290 = vmatpush1.bf16.msra.mxu0 %v273
        %291 = vmatprep.subr.bf16.mxu0 0
        %292 = vmatpush1.bf16.msra.mxu0 %v274
        %293 = vmatprep.subr.bf16.mxu0 0
        %294 = vmatpush1.bf16.msra.mxu0 %v275
        %295 = vmatprep.subr.bf16.mxu0 0
        %296 = vmatpush1.bf16.msra.mxu0 %v276
        %297 = vmatprep.subr.bf16.mxu0 0
        %298 = vmatpush1.bf16.msra.mxu0 %v277
        %299 = vmatprep.subr.bf16.mxu0 0
        %300 = vmatpush1.bf16.msra.mxu0 %v278
        %301 = vmatprep.subr.bf16.mxu0 0
        %302 = vmatpush1.bf16.msra.mxu0 %v279
        %303 = vmatprep.subr.bf16.mxu0 0
        %304 = vmatpush1.bf16.msra.mxu0 %v280
        %305 = vmatprep.subr.bf16.mxu0 0
        %306 = vmatpush1.bf16.msra.mxu0 0
        %307 = vmatprep.subr.bf16.mxu0 0
        %308 = vmatpush1.bf16.msra.mxu0 0
        %309 = vmatprep.subr.bf16.mxu0 0
        %310 = vmatpush1.bf16.msra.mxu0 0
        %311 = vmatprep.subr.bf16.mxu0 0
        %312 = vmatpush1.bf16.msra.mxu0 0
        %313 = vmatprep.subr.bf16.mxu0 0
        %314 = vmatpush1.bf16.msra.mxu0 0
        %315 = vmatprep.subr.bf16.mxu0 0
        %316 = vmatpush1.bf16.msra.mxu0 0
        %317 = vmatprep.subr.bf16.mxu0 0
        %318 = vmatpush1.bf16.msra.mxu0 0
        %319 = vmatprep.subr.bf16.mxu0 0
        %320 = vmatpush1.bf16.msra.mxu0 0
        %321 = vmatprep.mubr.bf16.mxu0 0
        %322 = vmatmul.mubr.bf16.gmra.mrb[0].mxu0 %v239
        %v323 = vpop.f32.mrb[0].mxu0
        %v324 = vadd.f32 0.0, %v323
        %v325 = vpop.f32.mrb[0].mxu0
        %v326 = vpop.f32.mrb[0].mxu0
        %v327 = vadd.f32 0.0, %v326
        %v328 = vpop.f32.mrb[0].mxu0
        %329 = vdwg.mxu0
        %v330 = vld [vmem:[#allocation7] sm:$0x1]
        %v331 = vadd.f32 %v324, %v327
        %v332 = vrot.slane %v331, 4
        %v333 = vadd.f32 %v331, %v332
        %v334 = vrot.slane %v333, 2
        %v335 = vadd.f32 %v333, %v334
        %v336 = vrot.slane %v335, 1
        %v337 = vadd.f32 %v335, %v336
        %v338 = vadd.f32 %v330, %v337
        %339 = vst [vmem:[#allocation7] sm:$0x1] %v338
        %v340 = vld [vmem:[#allocation8] sm:$0x1]
        %v341 = vmul.f32 %v324, %v324
        %v342 = vmul.f32 %v327, %v327
        %v343 = vadd.f32 %v341, %v342
        %v344 = vrot.slane %v343, 4
        %v345 = vadd.f32 %v343, %v344
        %v346 = vrot.slane %v345, 2
        %v347 = vadd.f32 %v345, %v346
        %v348 = vrot.slane %v347, 1
        %v349 = vadd.f32 %v347, %v348
        %v350 = vadd.f32 %v340, %v349
        %351 = vst [vmem:[#allocation8] sm:$0x1] %v350
        // Predicated region
        $region41: #{tpu_custom_call.1} parent=27 // pred_check
          %p352 = pneg %p95
        $region42: #{tpu_custom_call.1} parent=27 // pred_check_branch
          %354 = sbr.rel (%p352) target = $region44
        $region43: #{tpu_custom_call.1} parent=27 // pred_region
          %s356 = ssub.s32 16, 16
          %357 = vsyncadd [#allocation4], %s356
          %s359 = sshll.u32 [#allocation7], 4
          %s360 = int_to_ptr.vmem [resolvable:$true] %s359
          %362 = dma.vmem_to_hbm [thread:$0]  %s360, 16, %s2, [#allocation4]
        $region44: #{tpu_custom_call.1} parent=27 // pred_fallthru
          _
        // Predicated region
        $region45: #{tpu_custom_call.1} parent=27 // pred_check
          %p363 = pneg %p116
        $region46: #{tpu_custom_call.1} parent=27 // pred_check_branch
          %365 = sbr.rel (%p363) target = $region48
        $region47: #{tpu_custom_call.1} parent=27 // pred_region
          %s367 = ssub.s32 16, 16
          %368 = vsyncadd [#allocation9], %s367
          %s370 = sshll.u32 [#allocation8], 4
          %s371 = int_to_ptr.vmem [resolvable:$true] %s370
          %373 = dma.vmem_to_hbm [thread:$0]  %s371, 16, %s3, [#allocation9]
        $region48: #{tpu_custom_call.1} parent=27 // pred_fallthru
          _
        // Predicated region
        $region49: #{tpu_custom_call.1} parent=27 // pred_check
          %p374 = pneg %p95
        $region50: #{tpu_custom_call.1} parent=27 // pred_check_branch
          %376 = sbr.rel (%p374) target = $region52
        $region51: #{tpu_custom_call.1} parent=27 // pred_region
          %377 = dma.done [#allocation4], 16
        $region52: #{tpu_custom_call.1} parent=27 // pred_fallthru
          _
        // Predicated region
        $region53: #{tpu_custom_call.1} parent=27 // pred_check
          %p378 = pneg %p116
        $region54: #{tpu_custom_call.1} parent=27 // pred_check_branch
          %380 = sbr.rel (%p378) target = $region56
        $region55: #{tpu_custom_call.1} parent=27 // pred_region
          %381 = dma.done [#allocation9], 16
        $region56: #{tpu_custom_call.1} parent=27 // pred_fallthru
          _
      $region28: #{tpu_custom_call.1} parent=5 // pred_fallthru
        _
      %p382 = scmp.le.s32.totalorder 2, %s16
      // Predicated region
      $region57: #{tpu_custom_call.1} parent=5 // pred_check
        %p383 = pneg %p382
      $region58: #{tpu_custom_call.1} parent=5 // pred_check_branch
        %385 = sbr.rel (%p383) target = $region60
      $region59: #{tpu_custom_call.1} parent=5 // pred_region
        %s386 = ssub.s32 %s16, 2
      $region60: #{tpu_custom_call.1} parent=5 // pred_fallthru
        _
    $region6: #{tpu_custom_call.1} parent=1 // loop_footer
      %s20 = sadd.s32 1, %s16
    $region7: #{tpu_custom_call.1} parent=1 // loop_footer_branch
      %15 = sbr.rel target = $region3
    $region8: #{tpu_custom_call.1} parent=1 // loop_exit
      _
    %387 = vsyncpa [#allocation3], 1
    %s388 = scalar_lea.sflag [#allocation3], 1
    %389 = vsyncpa %s388, 1
    %390 = vsyncpa [#allocation6], 1
    %391 = vsyncpa [#allocation4], 1
    %s392 = scalar_lea.sflag [#allocation4], 1
    %393 = vsyncpa %s392, 1
    %394 = vsyncpa [#allocation9], 1

</llo_original>
